<compile_context>
chip_gen: v7x
topology: tpu7x:2x2x1
jax: 0.10.0
libtpu: 0.0.40
codegen_flags: <defaults>
</compile_context>

<pallas_src>
import functools

import jax
import jax.numpy as jnp
from jax import lax
from jax.experimental import pallas as pl
from jax.experimental.pallas import tpu as pltpu

_LANES = 128


def _tile_config():
    """(max block rows, vmem_limit_bytes or None) for the local TPU generation."""
    try:
        kind = jax.devices()[0].device_kind.lower()
    except Exception:  # no device info — fall through to conservative default
        kind = ""
    if "v7" in kind:
        # 3.2 TB/s HBM: a 4096-row step is only ~1.3 us, so per-step overhead
        # (~0.35 us) would be ~25% of wall.  16384-row f32 tiles (2 inputs x
        # 2 pipeline buffers = 32 MiB) need the scoped-VMEM limit raised
        # explicitly — v7x only has 64 MiB physical VMEM per TensorCore.
        return 16384, 48 * 1024 * 1024
    if "v6" in kind:
        # 8192-row f32 tiles -> 16 MiB pipelined, within the 32 MiB default.
        return 8192, None
    # v5e (16 MiB default scoped VMEM) and unknown chips: conservative.
    return 4096, None


def _rmse_partial_kernel(yp_ref, yt_ref, out_ref, *, block_rows, valid_rows):
    """Accumulate per-lane partial sums of (pred - true)^2 into out_ref (1,128)."""
    s = pl.program_id(0)

    @pl.when(s == 0)
    def _():
        out_ref[...] = jnp.zeros_like(out_ref)

    # Native-dtype DMA; upcast to f32 for the arithmetic.
    d = yp_ref[...].astype(jnp.float32) - yt_ref[...].astype(jnp.float32)
    sq = d * d

    if valid_rows % block_rows != 0:
        # Only the ragged final block reads rows past the end of the array;
        # gate the iota row-mask so interior blocks take the unmasked path.
        is_last = s == pl.num_programs(0) - 1

        @pl.when(jnp.logical_not(is_last))
        def _():
            out_ref[...] += jnp.sum(sq, axis=0, keepdims=True)

        @pl.when(is_last)
        def _():
            row = s * block_rows + lax.broadcasted_iota(jnp.int32, sq.shape, 0)
            masked = jnp.where(row < valid_rows, sq, 0.0)
            out_ref[...] += jnp.sum(masked, axis=0, keepdims=True)
    else:
        out_ref[...] += jnp.sum(sq, axis=0, keepdims=True)


def rmse_loss(y_pred, y_true):
    """Pallas equivalent of torch.sqrt(nn.MSELoss()(y_pred, y_true))."""
    assert y_pred.shape == y_true.shape, "shapes must match"
    n = y_pred.size

    # Flatten in native dtype (ravel of a contiguous array is copy-free).
    yp = jnp.ravel(y_pred)
    yt = jnp.ravel(y_true)

    rows = n // _LANES          # full 128-lane rows handled by the kernel
    tail = n - rows * _LANES    # <=127 trailing elements handled in epilogue

    if rows == 0:
        # Tiny input: not worth a kernel launch.
        d = yp.astype(jnp.float32) - yt.astype(jnp.float32)
        return jnp.sqrt(jnp.sum(d * d) / jnp.float32(n))

    block_rows_max, vmem_limit = _tile_config()
    block_rows = rows if rows <= block_rows_max else block_rows_max
    steps = pl.cdiv(rows, block_rows)

    # Lane-aligned inputs: pure reshape, zero extra HBM traffic.
    # Unaligned inputs: kernel consumes the aligned prefix; the tail is a
    # tiny epilogue below (no full-array jnp.pad copies).
    if tail:
        yp_main = yp[: rows * _LANES].reshape(rows, _LANES)
        yt_main = yt[: rows * _LANES].reshape(rows, _LANES)
    else:
        yp_main = yp.reshape(rows, _LANES)
        yt_main = yt.reshape(rows, _LANES)

    kernel = functools.partial(
        _rmse_partial_kernel, block_rows=block_rows, valid_rows=rows,
    )

    cost = pl.CostEstimate(
        flops=3 * rows * _LANES,
        transcendentals=0,
        bytes_accessed=rows * _LANES * (jnp.dtype(y_pred.dtype).itemsize
                                        + jnp.dtype(y_true.dtype).itemsize),
    )

    cp_kwargs = dict(dimension_semantics=("arbitrary",))
    if vmem_limit is not None:
        cp_kwargs["vmem_limit_bytes"] = vmem_limit

    partials = pl.pallas_call(
        kernel,
        out_shape=jax.ShapeDtypeStruct((1, _LANES), jnp.float32),
        grid_spec=pltpu.PrefetchScalarGridSpec(
            num_scalar_prefetch=0,
            grid=(steps,),
            in_specs=[
                pl.BlockSpec((block_rows, _LANES), lambda s: (s, 0)),
                pl.BlockSpec((block_rows, _LANES), lambda s: (s, 0)),
            ],
            out_specs=pl.BlockSpec((1, _LANES), lambda s: (0, 0)),
        ),
        compiler_params=pltpu.CompilerParams(**cp_kwargs),
        cost_estimate=cost,
    )(yp_main, yt_main)

    # Tiny epilogue: cross-lane reduce of 128 partials (+ <=127 tail elems),
    # divide by the TOTAL element count, sqrt.
    total = jnp.sum(partials)
    if tail:
        dt = yp[rows * _LANES:].astype(jnp.float32) - yt[rows * _LANES:].astype(jnp.float32)
        total = total + jnp.sum(dt * dt)
    return jnp.sqrt(total / jnp.float32(n))


if __name__ == "__main__":
    key = jax.random.PRNGKey(0)
    k1, k2, k3, k4 = jax.random.split(key, 4)

    # LSTM-style prediction/target tensors: (batch=2, seq=8, hidden=32), f32.
    y_pred = jax.random.normal(k1, (2, 8, 32), dtype=jnp.float32)
    y_true = jax.random.normal(k2, (2, 8, 32), dtype=jnp.float32)

    loss = jax.block_until_ready(rmse_loss(y_pred, y_true))
    ref = jnp.sqrt(jnp.mean((y_pred - y_true) ** 2))
    assert jnp.allclose(loss, ref, rtol=1e-5, atol=1e-6), (loss, ref)

    # Native-dtype (bf16) + non-lane-aligned shape: exercises in-kernel upcast,
    # the aligned-prefix path and the wrapper tail epilogue.
    yp_bf = jax.random.normal(k3, (3, 5, 31), dtype=jnp.bfloat16)
    yt_bf = jax.random.normal(k4, (3, 5, 31), dtype=jnp.bfloat16)
    loss_bf = jax.block_until_ready(rmse_loss(yp_bf, yt_bf))
    ref_bf = jnp.sqrt(jnp.mean(
        (yp_bf.astype(jnp.float32) - yt_bf.astype(jnp.float32)) ** 2))
    assert jnp.allclose(loss_bf, ref_bf, rtol=1e-5, atol=1e-6), (loss_bf, ref_bf)

    print("KERNEL_OK")
</pallas_src>

<mosaic_0001>
module attributes {stable_mosaic.version = 11 : i64} {
  func.func @_rmse_partial_kernel(%arg0: i32, %arg1: memref<4x128xf32, #tpu.memory_space<vmem>>, %arg2: memref<4x128xf32, #tpu.memory_space<vmem>>, %arg3: memref<1x128xf32, #tpu.memory_space<vmem>>) attributes {dimension_semantics = [#tpu.dimension_semantics<arbitrary>], iteration_bounds = array<i64: 1>, scalar_prefetch = 0 : i64, scratch_operands = 0 : i64, tpu.core_type = #tpu.core_type<tc>, window_params = [{transform_indices = @transform_0, window_bounds = array<i64: 4, 128>}, {transform_indices = @transform_1, window_bounds = array<i64: 4, 128>}, {pipeline_mode = #tpu.pipeline_mode<synchronous>, transform_indices = @transform_2, window_bounds = array<i64: 1, 128>}]} {
    %c0_i32 = arith.constant 0 : i32
    %0 = arith.cmpi eq, %arg0, %c0_i32 : i32
    %1 = arith.extui %0 : i1 to i32
    %c0_i32_0 = arith.constant 0 : i32
    %2 = arith.cmpi ne, %1, %c0_i32_0 : i32
    scf.if %2 {
      %cst_8 = arith.constant 0.000000e+00 : f32
      %12 = vector.broadcast %cst_8 : f32 to vector<1x128xf32>
      %c0_9 = arith.constant 0 : index
      %c0_10 = arith.constant 0 : index
      %13 = vector.load %arg3[%c0_9, %c0_10] : memref<1x128xf32, #tpu.memory_space<vmem>>, vector<1x128xf32>
      tpu.vector_store %arg3[%c0_9, %c0_10], %12 {strides = array<i32>} : memref<1x128xf32, #tpu.memory_space<vmem>>, vector<1x128xf32>,
    } else {
    }
    %c0 = arith.constant 0 : index
    %c0_1 = arith.constant 0 : index
    %3 = vector.load %arg1[%c0, %c0_1] : memref<4x128xf32, #tpu.memory_space<vmem>>, vector<4x128xf32>
    %c0_2 = arith.constant 0 : index
    %c0_3 = arith.constant 0 : index
    %4 = vector.load %arg2[%c0_2, %c0_3] : memref<4x128xf32, #tpu.memory_space<vmem>>, vector<4x128xf32>
    %5 = arith.subf %3, %4 : vector<4x128xf32>
    %6 = arith.mulf %5, %5 : vector<4x128xf32>
    %c0_4 = arith.constant 0 : index
    %c0_5 = arith.constant 0 : index
    %7 = vector.load %arg3[%c0_4, %c0_5] : memref<1x128xf32, #tpu.memory_space<vmem>>, vector<1x128xf32>
    %cst = arith.constant dense<0.000000e+00> : vector<128xf32>
    %8 = vector.multi_reduction <add>, %6, %cst [0] : vector<4x128xf32> to vector<128xf32>
    %9 = vector.shape_cast %8 : vector<128xf32> to vector<1x128xf32>
    %10 = arith.addf %7, %9 : vector<1x128xf32>
    %c0_6 = arith.constant 0 : index
    %c0_7 = arith.constant 0 : index
    %11 = vector.load %arg3[%c0_6, %c0_7] : memref<1x128xf32, #tpu.memory_space<vmem>>, vector<1x128xf32>
    tpu.vector_store %arg3[%c0_6, %c0_7], %10 {strides = array<i32>} : memref<1x128xf32, #tpu.memory_space<vmem>>, vector<1x128xf32>,
    return
  }
  func.func @transform_0(%arg0: i32) -> (i32, i32) {
    %c0_i32 = arith.constant 0 : i32
    %c0_i32_0 = arith.constant 0 : i32
    return %arg0, %c0_i32 : i32, i32
  }
  func.func @transform_1(%arg0: i32) -> (i32, i32) {
    %c0_i32 = arith.constant 0 : i32
    %c0_i32_0 = arith.constant 0 : i32
    return %arg0, %c0_i32 : i32, i32
  }
  func.func @transform_2(%arg0: i32) -> (i32, i32) {
    %c0_i32 = arith.constant 0 : i32
    %c0_i32_0 = arith.constant 0 : i32
    %c0_i32_1 = arith.constant 0 : i32
    return %c0_i32, %c0_i32_0 : i32, i32
  }
}

</mosaic_0001>

<llo_original>
// kernel: tpu_custom_call.1
$region0: #{tpu_custom_call.1}
  #allocation0 [shape = 'u32[]', space=smem, size = 0x4, offset = 0x4, fixed_abs, tag = 'smem constant byte address 0x4 - core index']
  #allocation1 [shape = 'u32[144,128]{1,0:T(1,128)}', space=vmem, size = 0x12000, scoped, tag = 'internal scratch']
  %s0 = inlined_call_operand.hbm [shape: f32[4,128], index: 0, kind: input, shape index: {}]
  %s1 = inlined_call_operand.hbm [shape: f32[4,128], index: 1, kind: input, shape index: {}]
  %s2 = inlined_call_operand.hbm [shape: f32[1,128], index: 2, kind: output, shape index: {}]
  %s3 = sld [smem:[#allocation0]]
  $region30: #{tpu_custom_call.1} parent=0
    _
  %s5 = ssub.s32 1, %s3
  %s6 = scalar_select 0, %s5, %s3
  $region1: #{tpu_custom_call.1} parent=0
    #allocation2 [shape = 'u8[2048]{0}', space=vmem, size = 0x800, scoped, tag = 'input window, operand 0, single buffered']
    #allocation3 [shape = 's32[1]{0}', space=sflag, size = 0x4, scoped, tag = 'scoped memory for tpu_custom_call.1']
    #allocation4 [shape = 's32[1]{0}', space=sflag, size = 0x4, scoped, tag = 'scoped memory for tpu_custom_call.1']
    #allocation5 [shape = 'u8[2048]{0}', space=vmem, size = 0x800, scoped, tag = 'input window, operand 1, single buffered']
    #allocation6 [shape = 's32[1]{0}', space=sflag, size = 0x4, scoped, tag = 'scoped memory for tpu_custom_call.1']
    #allocation7 [shape = 'u8[512]{0}', space=vmem, size = 0x400, scoped, tag = 'output window, operand 0, single buffered']
    %7 = vsyncpa [#allocation3], 0
    %8 = vsyncpa [#allocation6], 0
    %9 = vsyncpa [#allocation4], 0
    // Predicated region
    $region2: #{tpu_custom_call.1} parent=1 // pred_check
      _
    $region3: #{tpu_custom_call.1} parent=1 // pred_check_branch
      %11 = sbr.rel (0) target = $region5
    $region4: #{tpu_custom_call.1} parent=1 // pred_region
      %s13 = ssub.s32 64, 64
      %14 = vsyncadd [#allocation3], %s13
      %s16 = sshll.u32 [#allocation2], 4
      %s17 = int_to_ptr.vmem [resolvable:$true] %s16
      %19 = dma.hbm_to_vmem [thread:$0]  %s0, 64, %s17, [#allocation3]
    $region5: #{tpu_custom_call.1} parent=1 // pred_fallthru
      _
    // Predicated region
    $region6: #{tpu_custom_call.1} parent=1 // pred_check
      _
    $region7: #{tpu_custom_call.1} parent=1 // pred_check_branch
      %21 = sbr.rel (0) target = $region9
    $region8: #{tpu_custom_call.1} parent=1 // pred_region
      %s23 = ssub.s32 64, 64
      %24 = vsyncadd [#allocation6], %s23
      %s26 = sshll.u32 [#allocation5], 4
      %s27 = int_to_ptr.vmem [resolvable:$true] %s26
      %29 = dma.hbm_to_vmem [thread:$0]  %s1, 64, %s27, [#allocation6]
    $region9: #{tpu_custom_call.1} parent=1 // pred_fallthru
      _
    // Predicated region
    $region10: #{tpu_custom_call.1} parent=1 // pred_check
      _
    $region11: #{tpu_custom_call.1} parent=1 // pred_check_branch
      %31 = sbr.rel (0) target = $region13
    $region12: #{tpu_custom_call.1} parent=1 // pred_region
      %32 = dma.done [#allocation3], 64
    $region13: #{tpu_custom_call.1} parent=1 // pred_fallthru
      _
    // Predicated region
    $region14: #{tpu_custom_call.1} parent=1 // pred_check
      _
    $region15: #{tpu_custom_call.1} parent=1 // pred_check_branch
      %34 = sbr.rel (0) target = $region17
    $region16: #{tpu_custom_call.1} parent=1 // pred_region
      %35 = dma.done [#allocation6], 64
    $region17: #{tpu_custom_call.1} parent=1 // pred_fallthru
      _
    %p36 = scmp.eq.s32.totalorder 0, 0
    // Predicated region
    $region18: #{tpu_custom_call.1} parent=1 // pred_check
      %p37 = pneg %p36
    $region19: #{tpu_custom_call.1} parent=1 // pred_check_branch
      %39 = sbr.rel (%p37) target = $region21
    $region20: #{tpu_custom_call.1} parent=1 // pred_region
      %40 = vst [vmem:[#allocation7] sm:$0x1] 0.0
    $region21: #{tpu_custom_call.1} parent=1 // pred_fallthru
      _
    %v41 = vld [vmem:[#allocation2] sm:$0xf]
    %v42 = vld [vmem:[#allocation5] sm:$0xf]
    %v43 = vsub.f32 %v41, %v42
    %v44 = vmul.f32 %v43, %v43
    %v45 = vld [vmem:[#allocation7] sm:$0x1]
    %vm46 = vcmask 1043456
    %v47 = vsel %vm46, %v44, 0.0
    %v48 = vrot.slane %v47, 4
    %v49 = vadd.f32 %v47, %v48
    %v50 = vrot.slane %v49, 2
    %v51 = vadd.f32 %v49, %v50
    %v52 = vrot.slane %v51, 1
    %v53 = vadd.f32 %v51, %v52
    %v54 = vadd.f32 %v45, %v53
    %55 = vst [vmem:[#allocation7] sm:$0x1] %v54
    // Predicated region
    $region22: #{tpu_custom_call.1} parent=1 // pred_check
      _
    $region23: #{tpu_custom_call.1} parent=1 // pred_check_branch
      %57 = sbr.rel (0) target = $region25
    $region24: #{tpu_custom_call.1} parent=1 // pred_region
      %s59 = ssub.s32 16, 16
      %60 = vsyncadd [#allocation4], %s59
      %s62 = sshll.u32 [#allocation7], 4
      %s63 = int_to_ptr.vmem [resolvable:$true] %s62
      %65 = dma.vmem_to_hbm [thread:$0]  %s63, 16, %s2, [#allocation4]
    $region25: #{tpu_custom_call.1} parent=1 // pred_fallthru
      _
    // Predicated region
    $region26: #{tpu_custom_call.1} parent=1 // pred_check
      _
    $region27: #{tpu_custom_call.1} parent=1 // pred_check_branch
      %67 = sbr.rel (0) target = $region29
    $region28: #{tpu_custom_call.1} parent=1 // pred_region
      %68 = dma.done [#allocation4], 16
    $region29: #{tpu_custom_call.1} parent=1 // pred_fallthru
      _
    %69 = vsyncpa [#allocation3], 1
    %70 = vsyncpa [#allocation6], 1
    %71 = vsyncpa [#allocation4], 1

</llo_original>
